<compile_context>
chip_gen: v5e
topology: v5e:2x2
jax: 0.10.0
libtpu: 0.0.40
codegen_flags: <defaults>
</compile_context>

<pallas_src>
import math

import jax
import jax.numpy as jnp
from jax.experimental import pallas as pl
from jax.experimental.pallas import tpu as pltpu


_HALF_PI = 0.5 * math.pi
_INV_TWO_PI = 1.0 / (2.0 * math.pi)
_TWO_PI_HI = 6.28125                      # exact in float32 (201/32)
_TWO_PI_LO = 2.0 * math.pi - 6.28125      # remainder, ~1.9353e-3

# Odd polynomial coefficients for sin on [-pi, pi] (Taylor through x^15;
# truncation error ~8e-7 at |x| = pi, far below the f32 output tolerance).
_S3 = -1.0 / 6.0
_S5 = 1.0 / 120.0
_S7 = -1.0 / 5040.0
_S9 = 1.0 / 362880.0
_S11 = -1.0 / 39916800.0
_S13 = 1.0 / 6227020800.0
_S15 = -1.0 / 1307674368000.0


def _sinusoidal_kernel(t_ref, fp_ref, out_ref):
    # t_ref:   (block_b, tcols) f32 — timestep per row (tcols == 1), or
    #                                 lane-packed timesteps (tcols == width).
    # fp_ref:  (2, width)       f32 — row 0: frequencies, row 1: phase (0 | pi/2).
    # out_ref: (block_b, width)     — [sin(t*f) | cos(t*f)] (lane-packed if dim<128).
    freqs = fp_ref[0:1, :]
    phase = fp_ref[1:2, :]

    # Outer product via broadcast multiply on the VPU (deliberately not MXU),
    # with the cos-half phase folded in BEFORE range reduction so the reduced
    # argument stays in [-pi, pi].
    args = t_ref[...] * freqs + phase

    # Cody-Waite range reduction into [-pi, pi]. Exact while n*201 <= 2^24.
    n = jnp.floor(args * _INV_TWO_PI + 0.5)
    r = (args - n * _TWO_PI_HI) - n * _TWO_PI_LO

    # Fixed-range odd polynomial sin on the reduced argument (no second,
    # redundant range reduction inside a library sin).
    r2 = r * r
    p = _S15
    p = p * r2 + _S13
    p = p * r2 + _S11
    p = p * r2 + _S9
    p = p * r2 + _S7
    p = p * r2 + _S5
    p = p * r2 + _S3
    p = p * r2 + 1.0
    out_ref[...] = (r * p).astype(out_ref.dtype)


def sinusoidal_position_embeddings(time: jax.Array, dim: int,
                                   out_dtype=jnp.float32) -> jax.Array:
    """Pallas-backed equivalent of SinusoidalPositionEmbeddings(dim)(time)."""
    assert time.ndim == 1, "time must be a 1-D vector of timesteps"
    assert dim % 2 == 0 and dim >= 4, "dim must be even and >= 4"
    b = time.shape[0]
    half_dim = dim // 2

    # Frequencies computed exactly as the PyTorch forward does (constant in
    # `dim`), duplicated to full width; phase row selects sin (0) vs cos (pi/2).
    scale = math.log(10000.0) / (half_dim - 1)
    freqs = jnp.exp(jnp.arange(half_dim, dtype=jnp.float32) * -scale)
    freqs_full = jnp.concatenate([freqs, freqs])                          # (dim,)
    phase_full = jnp.concatenate(
        [jnp.zeros((half_dim,), jnp.float32),
         jnp.full((half_dim,), _HALF_PI, jnp.float32)])                   # (dim,)

    # Lane-dense packing for narrow embeddings: put 128//dim embeddings per
    # output row so stores are full-lane (unmasked) vst.
    pack = 128 // dim if (dim < 128 and 128 % dim == 0) else 1
    rows = pl.cdiv(b, pack)
    b_pad = rows * pack
    width = dim * pack

    t32 = time.astype(jnp.float32)
    if b_pad != b:
        t32 = jnp.concatenate([t32, jnp.zeros((b_pad - b,), jnp.float32)])

    if pack == 1:
        t_in = t32.reshape(rows, 1)
    else:
        # Each packed timestep repeated `dim` lanes wide, matching the tiled
        # freq/phase layout below.
        t_in = jnp.repeat(t32.reshape(rows, pack), dim, axis=1)           # (rows, width)

    fp = jnp.stack([jnp.tile(freqs_full, pack),
                    jnp.tile(phase_full, pack)])                          # (2, width)

    # Fixed-size 8-aligned row tiles; Pallas handles a ragged last block. For
    # rows > 256 this also yields >=2 "parallel" grid steps (v7x megacore).
    block_b = rows if rows <= 256 else 256
    grid = (pl.cdiv(rows, block_b),)
    tcols = t_in.shape[1]

    out = pl.pallas_call(
        _sinusoidal_kernel,
        out_shape=jax.ShapeDtypeStruct((rows, width), out_dtype),
        grid_spec=pltpu.PrefetchScalarGridSpec(
            num_scalar_prefetch=0,
            grid=grid,
            in_specs=[
                pl.BlockSpec((block_b, tcols), lambda i: (i, 0)),
                pl.BlockSpec((2, width), lambda i: (0, 0)),
            ],
            out_specs=pl.BlockSpec((block_b, width), lambda i: (i, 0)),
        ),
        compiler_params=pltpu.CompilerParams(
            dimension_semantics=("parallel",)),
    )(t_in, fp)

    out = out.reshape(b_pad, dim)
    if b_pad != b:
        out = out[:b]
    return out


def _reference(time: jax.Array, dim: int) -> jax.Array:
    # Pure-JAX reference matching the PyTorch forward exactly.
    half_dim = dim // 2
    emb = math.log(10000.0) / (half_dim - 1)
    emb = jnp.exp(jnp.arange(half_dim, dtype=jnp.float32) * -emb)
    emb = time.astype(jnp.float32)[:, None] * emb[None, :]
    return jnp.concatenate([jnp.sin(emb), jnp.cos(emb)], axis=-1)


if __name__ == "__main__":
    key = jax.random.PRNGKey(0)
    batch = 8
    dim = 128  # lane-dense output width (multiple of 128)

    # Deterministic diffusion-style integer timesteps in [0, 1000).
    time = jax.random.randint(key, (batch,), 0, 1000).astype(jnp.float32)

    out = sinusoidal_position_embeddings(time, dim)
    out = jax.block_until_ready(out)
    ref = _reference(time, dim)
    assert out.shape == (batch, dim)
    # Outputs are bounded in [-1, 1]; absolute tolerance dominates. Actual
    # error of the reduced-range polynomial sin vs XLA's sin/cos is ~1e-6.
    assert jnp.allclose(out, ref, atol=1e-3, rtol=1e-3), "mismatch vs reference"

    # Narrow embedding width -> exercises the lane-packed (4 rows / 128 lanes)
    # path with unmasked full-lane stores.
    out32 = jax.block_until_ready(sinusoidal_position_embeddings(time, 32))
    assert out32.shape == (batch, 32)
    assert jnp.allclose(out32, _reference(time, 32), atol=1e-3, rtol=1e-3), \
        "mismatch vs reference (dim=32)"

    print("KERNEL_OK")
</pallas_src>

<mosaic_0001>
module attributes {stable_mosaic.version = 11 : i64} {
  func.func @_sinusoidal_kernel(%arg0: i32, %arg1: memref<8x1xf32, #tpu.memory_space<vmem>>, %arg2: memref<2x128xf32, #tpu.memory_space<vmem>>, %arg3: memref<8x128xf32, #tpu.memory_space<vmem>>) attributes {dimension_semantics = [#tpu.dimension_semantics<parallel>], iteration_bounds = array<i64: 1>, scalar_prefetch = 0 : i64, scratch_operands = 0 : i64, tpu.core_type = #tpu.core_type<tc>, window_params = [{transform_indices = @transform_0, window_bounds = array<i64: 8, 1>}, {pipeline_mode = #tpu.pipeline_mode<synchronous>, transform_indices = @transform_1, window_bounds = array<i64: 2, 128>}, {transform_indices = @transform_2, window_bounds = array<i64: 8, 128>}]} {
    %c0 = arith.constant 0 : index
    %c0_0 = arith.constant 0 : index
    %0 = vector.load %arg2[%c0, %c0_0] : memref<2x128xf32, #tpu.memory_space<vmem>>, vector<1x128xf32>
    %c1 = arith.constant 1 : index
    %c0_1 = arith.constant 0 : index
    %1 = vector.load %arg2[%c1, %c0_1] : memref<2x128xf32, #tpu.memory_space<vmem>>, vector<1x128xf32>
    %c0_2 = arith.constant 0 : index
    %c0_3 = arith.constant 0 : index
    %2 = vector.load %arg1[%c0_2, %c0_3] : memref<8x1xf32, #tpu.memory_space<vmem>>, vector<8x1xf32>
    %3 = vector.broadcast %2 : vector<8x1xf32> to vector<8x128xf32>
    %4 = vector.broadcast %0 : vector<1x128xf32> to vector<8x128xf32>
    %5 = arith.mulf %3, %4 : vector<8x128xf32>
    %6 = vector.broadcast %1 : vector<1x128xf32> to vector<8x128xf32>
    %7 = arith.addf %5, %6 : vector<8x128xf32>
    %cst = arith.constant 0.159154937 : f32
    %8 = vector.broadcast %cst : f32 to vector<8x128xf32>
    %9 = arith.mulf %7, %8 : vector<8x128xf32>
    %cst_4 = arith.constant 5.000000e-01 : f32
    %10 = vector.broadcast %cst_4 : f32 to vector<8x128xf32>
    %11 = arith.addf %9, %10 : vector<8x128xf32>
    %12 = math.floor %11 : vector<8x128xf32>
    %cst_5 = arith.constant 6.281250e+00 : f32
    %13 = vector.broadcast %cst_5 : f32 to vector<8x128xf32>
    %14 = arith.mulf %12, %13 : vector<8x128xf32>
    %15 = arith.subf %7, %14 : vector<8x128xf32>
    %cst_6 = arith.constant 0.00193530717 : f32
    %16 = vector.broadcast %cst_6 : f32 to vector<8x128xf32>
    %17 = arith.mulf %12, %16 : vector<8x128xf32>
    %18 = arith.subf %15, %17 : vector<8x128xf32>
    %19 = arith.mulf %18, %18 : vector<8x128xf32>
    %cst_7 = arith.constant -7.6471636E-13 : f32
    %20 = vector.broadcast %cst_7 : f32 to vector<8x128xf32>
    %21 = arith.mulf %20, %19 : vector<8x128xf32>
    %cst_8 = arith.constant 1.60590444E-10 : f32
    %22 = vector.broadcast %cst_8 : f32 to vector<8x128xf32>
    %23 = arith.addf %21, %22 : vector<8x128xf32>
    %24 = arith.mulf %23, %19 : vector<8x128xf32>
    %cst_9 = arith.constant -2.50521079E-8 : f32
    %25 = vector.broadcast %cst_9 : f32 to vector<8x128xf32>
    %26 = arith.addf %24, %25 : vector<8x128xf32>
    %27 = arith.mulf %26, %19 : vector<8x128xf32>
    %cst_10 = arith.constant 2.75573188E-6 : f32
    %28 = vector.broadcast %cst_10 : f32 to vector<8x128xf32>
    %29 = arith.addf %27, %28 : vector<8x128xf32>
    %30 = arith.mulf %29, %19 : vector<8x128xf32>
    %cst_11 = arith.constant -1.98412701E-4 : f32
    %31 = vector.broadcast %cst_11 : f32 to vector<8x128xf32>
    %32 = arith.addf %30, %31 : vector<8x128xf32>
    %33 = arith.mulf %32, %19 : vector<8x128xf32>
    %cst_12 = arith.constant 0.00833333377 : f32
    %34 = vector.broadcast %cst_12 : f32 to vector<8x128xf32>
    %35 = arith.addf %33, %34 : vector<8x128xf32>
    %36 = arith.mulf %35, %19 : vector<8x128xf32>
    %cst_13 = arith.constant -0.166666672 : f32
    %37 = vector.broadcast %cst_13 : f32 to vector<8x128xf32>
    %38 = arith.addf %36, %37 : vector<8x128xf32>
    %39 = arith.mulf %38, %19 : vector<8x128xf32>
    %cst_14 = arith.constant 1.000000e+00 : f32
    %40 = vector.broadcast %cst_14 : f32 to vector<8x128xf32>
    %41 = arith.addf %39, %40 : vector<8x128xf32>
    %42 = arith.mulf %18, %41 : vector<8x128xf32>
    %c0_15 = arith.constant 0 : index
    %c0_16 = arith.constant 0 : index
    %43 = vector.load %arg3[%c0_15, %c0_16] : memref<8x128xf32, #tpu.memory_space<vmem>>, vector<8x128xf32>
    tpu.vector_store %arg3[%c0_15, %c0_16], %42 {strides = array<i32>} : memref<8x128xf32, #tpu.memory_space<vmem>>, vector<8x128xf32>,
    return
  }
  func.func @transform_0(%arg0: i32) -> (i32, i32) {
    %c0_i32 = arith.constant 0 : i32
    %c0_i32_0 = arith.constant 0 : i32
    return %arg0, %c0_i32 : i32, i32
  }
  func.func @transform_1(%arg0: i32) -> (i32, i32) {
    %c0_i32 = arith.constant 0 : i32
    %c0_i32_0 = arith.constant 0 : i32
    %c0_i32_1 = arith.constant 0 : i32
    return %c0_i32, %c0_i32_0 : i32, i32
  }
  func.func @transform_2(%arg0: i32) -> (i32, i32) {
    %c0_i32 = arith.constant 0 : i32
    %c0_i32_0 = arith.constant 0 : i32
    return %arg0, %c0_i32 : i32, i32
  }
}

</mosaic_0001>

<llo_original>
// kernel: tpu_custom_call.1
$region0: #{tpu_custom_call.1}
  #allocation0 [shape = 'u32[]', space=smem, size = 0x4, offset = 0x4, fixed_abs, tag = 'smem constant byte address 0x4 - core index']
  #allocation1 [shape = 'u32[72,128]{1,0:T(1,128)}', space=vmem, size = 0x9000, scoped, tag = 'internal scratch']
  %s0 = inlined_call_operand.vmem [shape: f32[8,1], index: 0, kind: input, shape index: {}]
  %s1 = inlined_call_operand.vmem [shape: f32[2,128], index: 1, kind: input, shape index: {}]
  %s2 = inlined_call_operand.hbm [shape: f32[8,128], index: 2, kind: output, shape index: {}]
  %s3 = sld [smem:[#allocation0]]
  $region18: #{tpu_custom_call.1} parent=0
    _
  %s5 = ssub.s32 1, %s3
  %s6 = scalar_select 0, %s5, %s3
  $region1: #{tpu_custom_call.1} parent=0
    #allocation2 [shape = 'u8[4096]{0}', space=vmem, size = 0x1000, scoped, tag = 'output window, operand 0, single buffered']
    #allocation3 [shape = 's32[1]{0}', space=sflag, size = 0x4, scoped, tag = 'scoped memory for tpu_custom_call.1']
    %7 = vsyncpa [#allocation3], 0
    // Predicated region
    $region2: #{tpu_custom_call.1} parent=1 // pred_check
      _
    $region3: #{tpu_custom_call.1} parent=1 // pred_check_branch
      %9 = sbr.rel (0) target = $region5
    $region4: #{tpu_custom_call.1} parent=1 // pred_region
      _
    $region5: #{tpu_custom_call.1} parent=1 // pred_fallthru
      _
    // Predicated region
    $region6: #{tpu_custom_call.1} parent=1 // pred_check
      _
    $region7: #{tpu_custom_call.1} parent=1 // pred_check_branch
      %11 = sbr.rel (0) target = $region9
    $region8: #{tpu_custom_call.1} parent=1 // pred_region
      _
    $region9: #{tpu_custom_call.1} parent=1 // pred_fallthru
      _
    %v12 = vld [vmem:[%s1] sm:$0x1]
    %v13 = vld [vmem:[%s1 + $0x1] sm:$0x1]
    %v14 = vld [vmem:[%s0] sm:$0xff]
    %16 = vset.pattern.permute.xlu0 0
    %17 = vperm.xlu0 %16, %v14
    %v18 = vpop.permute.xlu0 %17
    %v20 = vperm.slane %v12, 0
    %v21 = vmul.f32 %v18, %v20
    %v22 = vperm.slane %v13, 0
    %v23 = vadd.f32 %v21, %v22
    %v24 = vmul.f32 %v23, 0.15915494
    %v25 = vadd.f32 %v24, 0.5
    %v26 = vfloor.f32 %v25
    %v27 = vmul.f32 %v26, 6.28125
    %v28 = vsub.f32 %v23, %v27
    %v29 = vmul.f32 %v26, 0.0019353072
    %v30 = vsub.f32 %v28, %v29
    %v31 = vmul.f32 %v30, %v30
    %v32 = vmul.f32 %v31, -7.6471636e-13
    %v33 = vadd.f32 %v32, 1.6059044e-10
    %v34 = vmul.f32 %v33, %v31
    %v35 = vadd.f32 %v34, -2.5052108e-08
    %v36 = vmul.f32 %v35, %v31
    %v37 = vadd.f32 %v36, 2.7557319e-06
    %v38 = vmul.f32 %v37, %v31
    %v39 = vadd.f32 %v38, -0.0001984127
    %v40 = vmul.f32 %v39, %v31
    %v41 = vadd.f32 %v40, 0.008333334
    %v42 = vmul.f32 %v41, %v31
    %v43 = vadd.f32 %v42, -0.16666667
    %v44 = vmul.f32 %v43, %v31
    %v45 = vadd.f32 %v44, 1.0
    %v46 = vmul.f32 %v30, %v45
    %47 = vst [vmem:[#allocation2] sm:$0xff] %v46
    // Predicated region
    $region10: #{tpu_custom_call.1} parent=1 // pred_check
      _
    $region11: #{tpu_custom_call.1} parent=1 // pred_check_branch
      %49 = sbr.rel (0) target = $region13
    $region12: #{tpu_custom_call.1} parent=1 // pred_region
      %51 = vsyncadd [#allocation3], 0
      %s53 = sshll.u32 [#allocation2], 4
      %s54 = int_to_ptr.vmem [resolvable:$true] %s53
      %s55 = sshll.u32 %s2, 4
      %s56 = int_to_ptr.hbm [resolvable:$true] %s55
      %58 = dma.vmem_to_hbm [thread:$0]  %s54, 128, %s56, [#allocation3]
    $region13: #{tpu_custom_call.1} parent=1 // pred_fallthru
      _
    // Predicated region
    $region14: #{tpu_custom_call.1} parent=1 // pred_check
      _
    $region15: #{tpu_custom_call.1} parent=1 // pred_check_branch
      %60 = sbr.rel (0) target = $region17
    $region16: #{tpu_custom_call.1} parent=1 // pred_region
      %62 = dma.done [#allocation3], 128
    $region17: #{tpu_custom_call.1} parent=1 // pred_fallthru
      _
    %63 = vsyncpa [#allocation3], 1

</llo_original>
